<compile_context>
chip_gen: v5e
topology: v5e:2x2
jax: 0.10.0
libtpu: 0.0.40
codegen_flags: <defaults>
</compile_context>

<pallas_src>
import functools
import math

import jax
import jax.numpy as jnp
from jax.experimental import pallas as pl
from jax.experimental.pallas import tpu as pltpu

_LANE = 128
# 2048 rows x 128 lanes x 4 B = 1 MiB per f32 tile; 4 inputs + 2 outputs,
# double-buffered ~= 12 MiB -> ample headroom on v7x's 64 MiB per-core VMEM
# while staying near the HBM roofline on v5e/v6e.
_MAX_TILE_ROWS = 2048
_VMEM_LIMIT_BYTES = 48 * 1024 * 1024


def _losses_and_diffs(pc_ref, pr_ref, rc_ref, rr_ref, *, beta, label_smoothing, ipo):
    pc = pc_ref[...].astype(jnp.float32)
    pr = pr_ref[...].astype(jnp.float32)
    rc = rc_ref[...].astype(jnp.float32)
    rr = rr_ref[...].astype(jnp.float32)

    d_chosen = pc - rc        # reused for chosen rewards
    d_rejected = pr - rr      # reused for rejected rewards
    logits = d_chosen - d_rejected

    if ipo:
        losses = (logits - 0.5 / beta) ** 2
    else:
        x = beta * logits
        # numerically stable log(sigmoid(x)) = min(x, 0) - log1p(exp(-|x|))
        log_sig = jnp.minimum(x, 0.0) - jnp.log1p(jnp.exp(-jnp.abs(x)))
        # exact identity: -ls(x)(1-s) - ls(-x)s == -ls(x) + s*x  (ls(-x)=ls(x)-x)
        losses = -log_sig
        if label_smoothing != 0.0:
            losses = losses + label_smoothing * x
    return losses, d_chosen, d_rejected


def _dpo_kernel_single(pc_ref, pr_ref, rc_ref, rr_ref,
                       loss_ref, cr_ref, rj_ref,
                       *, beta, label_smoothing, ipo, inv_b, correction):
    # Whole batch in one grid step: no accumulator, no pl.when machinery.
    losses, d_c, d_r = _losses_and_diffs(
        pc_ref, pr_ref, rc_ref, rr_ref,
        beta=beta, label_smoothing=label_smoothing, ipo=ipo)

    loss_ref[...] = ((jnp.sum(losses) - correction) * inv_b).reshape(1, 1)
    cr_ref[...] = (beta * d_c).astype(cr_ref.dtype)
    rj_ref[...] = (beta * d_r).astype(rj_ref.dtype)


def _dpo_kernel_multi(pc_ref, pr_ref, rc_ref, rr_ref,
                      loss_ref, cr_ref, rj_ref,
                      acc_ref,
                      *, beta, label_smoothing, ipo, inv_b, correction):
    i = pl.program_id(0)
    losses, d_c, d_r = _losses_and_diffs(
        pc_ref, pr_ref, rc_ref, rr_ref,
        beta=beta, label_smoothing=label_smoothing, ipo=ipo)

    @pl.when(i == 0)
    def _():
        acc_ref[...] = jnp.zeros_like(acc_ref)

    # Lane-wide accumulator: only a sublane (axis-0) reduce per grid step.
    acc_ref[...] += jnp.sum(losses, axis=0, keepdims=True)

    @pl.when(i == pl.num_programs(0) - 1)
    def _():
        # Single cross-lane reduce + pad correction + 1/B multiply, once.
        loss_ref[...] = ((jnp.sum(acc_ref[...]) - correction) * inv_b).reshape(1, 1)

    cr_ref[...] = (beta * d_c).astype(cr_ref.dtype)
    rj_ref[...] = (beta * d_r).astype(rj_ref.dtype)


def dpo_loss(policy_chosen_logps,
             policy_rejected_logps,
             reference_chosen_logps,
             reference_rejected_logps,
             *, beta, label_smoothing=0.0, ipo=False,
             max_tile_rows=_MAX_TILE_ROWS):
    (b,) = policy_chosen_logps.shape
    out_dtype = policy_chosen_logps.dtype

    rows = -(-b // _LANE)                    # ceil(B / 128)

    if rows <= max_tile_rows:
        # Single grid step: block == full array, no row padding required.
        tile_rows = rows
        rows_pad = rows
    else:
        # Align tile to the dtype's sublane packing (8 for 4-byte, 16 for
        # 2-byte) so the reward stores stay unmasked / vreg-dense.
        sub = 16 if jnp.dtype(out_dtype).itemsize == 2 else 8
        tile_rows = max(sub, (max_tile_rows // sub) * sub)
        rows_pad = -(-rows // tile_rows) * tile_rows

    b_pad = rows_pad * _LANE
    n_steps = rows_pad // tile_rows
    need_pad = b_pad != b

    # Zero-padded elements (jnp.pad default) contribute a compile-time
    # constant loss: log 2 on the sigmoid path (smoothing term is 0 at
    # logits==0), (0.5/beta)^2 for IPO.  Subtract once at finalize instead of
    # masking every tile.
    pad_const = (0.5 / float(beta)) ** 2 if ipo else math.log(2.0)
    correction = float(b_pad - b) * pad_const
    inv_b = 1.0 / float(b)

    def prep(x):
        if need_pad:
            x = jnp.pad(x, (0, b_pad - b))       # zeros -> constant correction
        return x.reshape(rows_pad, _LANE)        # free contiguous reshape

    args = tuple(prep(x) for x in (policy_chosen_logps,
                                   policy_rejected_logps,
                                   reference_chosen_logps,
                                   reference_rejected_logps))

    vec_spec = pl.BlockSpec((tile_rows, _LANE), lambda i: (i, 0))
    loss_spec = pl.BlockSpec((1, 1), lambda i: (0, 0))   # resident scalar loss

    common = dict(beta=float(beta), label_smoothing=float(label_smoothing),
                  ipo=bool(ipo), inv_b=inv_b, correction=correction)
    if n_steps == 1:
        kernel = functools.partial(_dpo_kernel_single, **common)
        scratch_shapes = []
    else:
        kernel = functools.partial(_dpo_kernel_multi, **common)
        scratch_shapes = [pltpu.VMEM((1, _LANE), jnp.float32)]

    # TODO(synk): v7x megacore variant — split the row-tile axis across the 2
    # TensorCores (leading "parallel" axis, per-core partial loss sums reduced
    # in the wrapper) instead of the serial resident accumulator.
    loss2d, cr2d, rj2d = pl.pallas_call(
        kernel,
        out_shape=(
            jax.ShapeDtypeStruct((1, 1), jnp.float32),
            jax.ShapeDtypeStruct((rows_pad, _LANE), out_dtype),
            jax.ShapeDtypeStruct((rows_pad, _LANE), out_dtype),
        ),
        grid=(n_steps,),
        in_specs=[vec_spec, vec_spec, vec_spec, vec_spec],
        out_specs=(loss_spec, vec_spec, vec_spec),
        scratch_shapes=scratch_shapes,
        compiler_params=pltpu.CompilerParams(
            dimension_semantics=("arbitrary",),
            vmem_limit_bytes=_VMEM_LIMIT_BYTES,
        ),
    )(*args)

    loss = loss2d.reshape(())
    chosen_rewards = cr2d.reshape(b_pad)
    rejected_rewards = rj2d.reshape(b_pad)
    if need_pad:
        chosen_rewards = chosen_rewards[:b]
        rejected_rewards = rejected_rewards[:b]
    return loss, chosen_rewards, rejected_rewards


def _dpo_loss_ref(pc, pr, rc, rr, *, beta, label_smoothing=0.0, ipo=False):
    pc, pr, rc, rr = (x.astype(jnp.float32) for x in (pc, pr, rc, rr))
    logits = (pc - pr) - (rc - rr)
    if ipo:
        losses = (logits - 1.0 / (2.0 * beta)) ** 2
    else:
        losses = (-jax.nn.log_sigmoid(beta * logits) * (1.0 - label_smoothing)
                  - jax.nn.log_sigmoid(-beta * logits) * label_smoothing)
    return losses.mean(), beta * (pc - rc), beta * (pr - rr)


if __name__ == "__main__":
    key = jax.random.PRNGKey(0)

    def make_inputs(b, k):
        ks = jax.random.split(k, 4)
        # log-probs are negative; scale for realism
        return tuple(-jnp.abs(jax.random.normal(kk, (b,), jnp.float32)) * 5.0
                     for kk in ks)

    configs = [
        dict(beta=0.1, label_smoothing=0.05, ipo=False),
        dict(beta=0.1, label_smoothing=0.0, ipo=False),
        dict(beta=0.1, label_smoothing=0.0, ipo=True),
    ]

    k1, k2, k3 = jax.random.split(key, 3)
    cases = [
        (8,    make_inputs(8, k1),    {}),                        # padded, single-step
        (256,  make_inputs(256, k2),  {}),                        # lane-aligned, no pad
        (2500, make_inputs(2500, k3), dict(max_tile_rows=8)),     # multi-step + padding
    ]

    for b, (pc, pr, rc, rr), extra in cases:
        for cfg in configs:
            loss, cr, rj = dpo_loss(pc, pr, rc, rr, **cfg, **extra)
            jax.block_until_ready((loss, cr, rj))

            ref_loss, ref_cr, ref_rj = _dpo_loss_ref(pc, pr, rc, rr, **cfg)

            assert loss.shape == () and cr.shape == (b,) and rj.shape == (b,)
            assert jnp.allclose(loss, ref_loss, rtol=1e-4, atol=1e-5), (
                b, cfg, loss, ref_loss)
            assert jnp.allclose(cr, ref_cr, rtol=1e-5, atol=1e-5), (b, cfg)
            assert jnp.allclose(rj, ref_rj, rtol=1e-5, atol=1e-5), (b, cfg)

    print("KERNEL_OK")
</pallas_src>

<mosaic_0001>
module attributes {stable_mosaic.version = 11 : i64} {
  func.func @_dpo_kernel_single(%arg0: i32, %arg1: memref<1x128xf32, #tpu.memory_space<vmem>>, %arg2: memref<1x128xf32, #tpu.memory_space<vmem>>, %arg3: memref<1x128xf32, #tpu.memory_space<vmem>>, %arg4: memref<1x128xf32, #tpu.memory_space<vmem>>, %arg5: memref<1x1xf32, #tpu.memory_space<vmem>>, %arg6: memref<1x128xf32, #tpu.memory_space<vmem>>, %arg7: memref<1x128xf32, #tpu.memory_space<vmem>>) attributes {dimension_semantics = [#tpu.dimension_semantics<arbitrary>], iteration_bounds = array<i64: 1>, scalar_prefetch = 0 : i64, scratch_operands = 0 : i64, tpu.core_type = #tpu.core_type<tc>, window_params = [{transform_indices = @transform_0, window_bounds = array<i64: 1, 128>}, {transform_indices = @transform_1, window_bounds = array<i64: 1, 128>}, {transform_indices = @transform_2, window_bounds = array<i64: 1, 128>}, {transform_indices = @transform_3, window_bounds = array<i64: 1, 128>}, {pipeline_mode = #tpu.pipeline_mode<synchronous>, transform_indices = @transform_4, window_bounds = array<i64: 1, 1>}, {transform_indices = @transform_5, window_bounds = array<i64: 1, 128>}, {transform_indices = @transform_6, window_bounds = array<i64: 1, 128>}]} {
    %c0 = arith.constant 0 : index
    %c0_0 = arith.constant 0 : index
    %0 = vector.load %arg1[%c0, %c0_0] : memref<1x128xf32, #tpu.memory_space<vmem>>, vector<1x128xf32>
    %c0_1 = arith.constant 0 : index
    %c0_2 = arith.constant 0 : index
    %1 = vector.load %arg2[%c0_1, %c0_2] : memref<1x128xf32, #tpu.memory_space<vmem>>, vector<1x128xf32>
    %c0_3 = arith.constant 0 : index
    %c0_4 = arith.constant 0 : index
    %2 = vector.load %arg3[%c0_3, %c0_4] : memref<1x128xf32, #tpu.memory_space<vmem>>, vector<1x128xf32>
    %c0_5 = arith.constant 0 : index
    %c0_6 = arith.constant 0 : index
    %3 = vector.load %arg4[%c0_5, %c0_6] : memref<1x128xf32, #tpu.memory_space<vmem>>, vector<1x128xf32>
    %4 = arith.subf %0, %2 : vector<1x128xf32>
    %5 = arith.subf %1, %3 : vector<1x128xf32>
    %6 = arith.subf %4, %5 : vector<1x128xf32>
    %cst = arith.constant 1.000000e-01 : f32
    %7 = vector.broadcast %cst : f32 to vector<1x128xf32>
    %8 = arith.mulf %7, %6 : vector<1x128xf32>
    %cst_7 = arith.constant 0.000000e+00 : f32
    %9 = vector.broadcast %cst_7 : f32 to vector<1x128xf32>
    %10 = arith.minimumf %8, %9 : vector<1x128xf32>
    %11 = math.absf %8 : vector<1x128xf32>
    %cst_8 = arith.constant 0.000000e+00 : f32
    %12 = vector.broadcast %cst_8 : f32 to vector<1x128xf32>
    %13 = arith.subf %12, %11 : vector<1x128xf32>
    %14 = math.exp %13 : vector<1x128xf32>
    %15 = math.log1p %14 : vector<1x128xf32>
    %16 = arith.subf %10, %15 : vector<1x128xf32>
    %cst_9 = arith.constant 0.000000e+00 : f32
    %17 = vector.broadcast %cst_9 : f32 to vector<1x128xf32>
    %18 = arith.subf %17, %16 : vector<1x128xf32>
    %cst_10 = arith.constant 5.000000e-02 : f32
    %19 = vector.broadcast %cst_10 : f32 to vector<1x128xf32>
    %20 = arith.mulf %19, %8 : vector<1x128xf32>
    %21 = arith.addf %18, %20 : vector<1x128xf32>
    %22 = vector.shape_cast %21 : vector<1x128xf32> to vector<1x1x128xf32>
    %cst_11 = arith.constant dense<0.000000e+00> : vector<1xf32>
    %23 = vector.multi_reduction <add>, %22, %cst_11 [1, 2] : vector<1x1x128xf32> to vector<1xf32>
    %24 = vector.shape_cast %23 : vector<1xf32> to vector<1x1x1xf32>
    %25 = vector.extract %24[0, 0, 0] : f32 from vector<1x1x1xf32>
    %cst_12 = arith.constant 83.177658 : f32
    %26 = arith.subf %25, %cst_12 : f32
    %cst_13 = arith.constant 1.250000e-01 : f32
    %27 = arith.mulf %26, %cst_13 : f32
    %28 = vector.broadcast %27 : f32 to vector<1x1xf32>
    %c0_14 = arith.constant 0 : index
    %c0_15 = arith.constant 0 : index
    %29 = vector.load %arg5[%c0_14, %c0_15] : memref<1x1xf32, #tpu.memory_space<vmem>>, vector<1x1xf32>
    tpu.vector_store %arg5[%c0_14, %c0_15], %28 {strides = array<i32>} : memref<1x1xf32, #tpu.memory_space<vmem>>, vector<1x1xf32>,
    %cst_16 = arith.constant 1.000000e-01 : f32
    %30 = vector.broadcast %cst_16 : f32 to vector<1x128xf32>
    %31 = arith.mulf %30, %4 : vector<1x128xf32>
    %c0_17 = arith.constant 0 : index
    %c0_18 = arith.constant 0 : index
    %32 = vector.load %arg6[%c0_17, %c0_18] : memref<1x128xf32, #tpu.memory_space<vmem>>, vector<1x128xf32>
    tpu.vector_store %arg6[%c0_17, %c0_18], %31 {strides = array<i32>} : memref<1x128xf32, #tpu.memory_space<vmem>>, vector<1x128xf32>,
    %cst_19 = arith.constant 1.000000e-01 : f32
    %33 = vector.broadcast %cst_19 : f32 to vector<1x128xf32>
    %34 = arith.mulf %33, %5 : vector<1x128xf32>
    %c0_20 = arith.constant 0 : index
    %c0_21 = arith.constant 0 : index
    %35 = vector.load %arg7[%c0_20, %c0_21] : memref<1x128xf32, #tpu.memory_space<vmem>>, vector<1x128xf32>
    tpu.vector_store %arg7[%c0_20, %c0_21], %34 {strides = array<i32>} : memref<1x128xf32, #tpu.memory_space<vmem>>, vector<1x128xf32>,
    return
  }
  func.func @transform_0(%arg0: i32) -> (i32, i32) {
    %c0_i32 = arith.constant 0 : i32
    %c0_i32_0 = arith.constant 0 : i32
    return %arg0, %c0_i32 : i32, i32
  }
  func.func @transform_1(%arg0: i32) -> (i32, i32) {
    %c0_i32 = arith.constant 0 : i32
    %c0_i32_0 = arith.constant 0 : i32
    return %arg0, %c0_i32 : i32, i32
  }
  func.func @transform_2(%arg0: i32) -> (i32, i32) {
    %c0_i32 = arith.constant 0 : i32
    %c0_i32_0 = arith.constant 0 : i32
    return %arg0, %c0_i32 : i32, i32
  }
  func.func @transform_3(%arg0: i32) -> (i32, i32) {
    %c0_i32 = arith.constant 0 : i32
    %c0_i32_0 = arith.constant 0 : i32
    return %arg0, %c0_i32 : i32, i32
  }
  func.func @transform_4(%arg0: i32) -> (i32, i32) {
    %c0_i32 = arith.constant 0 : i32
    %c0_i32_0 = arith.constant 0 : i32
    %c0_i32_1 = arith.constant 0 : i32
    return %c0_i32, %c0_i32_0 : i32, i32
  }
  func.func @transform_5(%arg0: i32) -> (i32, i32) {
    %c0_i32 = arith.constant 0 : i32
    %c0_i32_0 = arith.constant 0 : i32
    return %arg0, %c0_i32 : i32, i32
  }
  func.func @transform_6(%arg0: i32) -> (i32, i32) {
    %c0_i32 = arith.constant 0 : i32
    %c0_i32_0 = arith.constant 0 : i32
    return %arg0, %c0_i32 : i32, i32
  }
}

</mosaic_0001>

<llo_original>
// kernel: tpu_custom_call.1
$region0: #{tpu_custom_call.1}
  #allocation0 [shape = 'u32[]', space=smem, size = 0x4, offset = 0x4, fixed_abs, tag = 'smem constant byte address 0x4 - core index']
  #allocation1 [shape = 'u32[72,128]{1,0:T(1,128)}', space=vmem, size = 0x9000, scoped, tag = 'internal scratch']
  %s0 = inlined_call_operand.hbm [shape: f32[1,128], index: 0, kind: input, shape index: {}]
  %s1 = inlined_call_operand.hbm [shape: f32[1,128], index: 1, kind: input, shape index: {}]
  %s2 = inlined_call_operand.vmem [shape: f32[1,128], index: 2, kind: input, shape index: {}]
  %s3 = inlined_call_operand.vmem [shape: f32[1,128], index: 3, kind: input, shape index: {}]
  %s4 = inlined_call_operand.hbm [shape: f32[1,1], index: 4, kind: output, shape index: {0}]
  %s5 = inlined_call_operand.hbm [shape: f32[1,128], index: 5, kind: output, shape index: {1}]
  %s6 = inlined_call_operand.hbm [shape: f32[1,128], index: 6, kind: output, shape index: {2}]
  %7 = xla_tuple %s4, %s5, %s6
  %s8 = sld [smem:[#allocation0]]
  $region50: #{tpu_custom_call.1} parent=0
    _
  %s10 = ssub.s32 1, %s8
  %s11 = scalar_select 0, %s10, %s8
  $region1: #{tpu_custom_call.1} parent=0
    #allocation2 [shape = 'u8[512]{0}', space=vmem, size = 0x400, scoped, tag = 'input window, operand 0, single buffered']
    #allocation3 [shape = 's32[1]{0}', space=sflag, size = 0x4, scoped, tag = 'scoped memory for tpu_custom_call.1']
    #allocation4 [shape = 's32[1]{0}', space=sflag, size = 0x4, scoped, tag = 'scoped memory for tpu_custom_call.1']
    #allocation5 [shape = 'u8[512]{0}', space=vmem, size = 0x400, scoped, tag = 'input window, operand 1, single buffered']
    #allocation6 [shape = 's32[1]{0}', space=sflag, size = 0x4, scoped, tag = 'scoped memory for tpu_custom_call.1']
    #allocation7 [shape = 'u8[512]{0}', space=vmem, size = 0x400, scoped, tag = 'output window, operand 0, single buffered']
    #allocation8 [shape = 'u8[512]{0}', space=vmem, size = 0x400, scoped, tag = 'output window, operand 1, single buffered']
    #allocation9 [shape = 's32[1]{0}', space=sflag, size = 0x4, scoped, tag = 'scoped memory for tpu_custom_call.1']
    #allocation10 [shape = 'u8[512]{0}', space=vmem, size = 0x400, scoped, tag = 'output window, operand 2, single buffered']
    %12 = vsyncpa [#allocation3], 0
    %13 = vsyncpa [#allocation6], 0
    %14 = vsyncpa [#allocation4], 0
    %15 = vsyncpa [#allocation9], 0
    // Predicated region
    $region2: #{tpu_custom_call.1} parent=1 // pred_check
      _
    $region3: #{tpu_custom_call.1} parent=1 // pred_check_branch
      %17 = sbr.rel (0) target = $region5
    $region4: #{tpu_custom_call.1} parent=1 // pred_region
      %19 = vsyncadd [#allocation3], 0
      %s21 = sshll.u32 %s0, 4
      %s22 = int_to_ptr.hbm [resolvable:$true] %s21
      %s23 = sshll.u32 [#allocation2], 4
      %s24 = int_to_ptr.vmem [resolvable:$true] %s23
      %26 = dma.hbm_to_vmem [thread:$0]  %s22, 16, %s24, [#allocation3]
    $region5: #{tpu_custom_call.1} parent=1 // pred_fallthru
      _
    // Predicated region
    $region6: #{tpu_custom_call.1} parent=1 // pred_check
      _
    $region7: #{tpu_custom_call.1} parent=1 // pred_check_branch
      %28 = sbr.rel (0) target = $region9
    $region8: #{tpu_custom_call.1} parent=1 // pred_region
      %30 = vsyncadd [#allocation6], 0
      %s32 = sshll.u32 %s1, 4
      %s33 = int_to_ptr.hbm [resolvable:$true] %s32
      %s34 = sshll.u32 [#allocation5], 4
      %s35 = int_to_ptr.vmem [resolvable:$true] %s34
      %37 = dma.hbm_to_vmem [thread:$0]  %s33, 16, %s35, [#allocation6]
    $region9: #{tpu_custom_call.1} parent=1 // pred_fallthru
      _
    // Predicated region
    $region10: #{tpu_custom_call.1} parent=1 // pred_check
      _
    $region11: #{tpu_custom_call.1} parent=1 // pred_check_branch
      %39 = sbr.rel (0) target = $region13
    $region12: #{tpu_custom_call.1} parent=1 // pred_region
      _
    $region13: #{tpu_custom_call.1} parent=1 // pred_fallthru
      _
    // Predicated region
    $region14: #{tpu_custom_call.1} parent=1 // pred_check
      _
    $region15: #{tpu_custom_call.1} parent=1 // pred_check_branch
      %41 = sbr.rel (0) target = $region17
    $region16: #{tpu_custom_call.1} parent=1 // pred_region
      _
    $region17: #{tpu_custom_call.1} parent=1 // pred_fallthru
      _
    // Predicated region
    $region18: #{tpu_custom_call.1} parent=1 // pred_check
      _
    $region19: #{tpu_custom_call.1} parent=1 // pred_check_branch
      %43 = sbr.rel (0) target = $region21
    $region20: #{tpu_custom_call.1} parent=1 // pred_region
      %45 = dma.done [#allocation3], 16
    $region21: #{tpu_custom_call.1} parent=1 // pred_fallthru
      _
    // Predicated region
    $region22: #{tpu_custom_call.1} parent=1 // pred_check
      _
    $region23: #{tpu_custom_call.1} parent=1 // pred_check_branch
      %47 = sbr.rel (0) target = $region25
    $region24: #{tpu_custom_call.1} parent=1 // pred_region
      %49 = dma.done [#allocation6], 16
    $region25: #{tpu_custom_call.1} parent=1 // pred_fallthru
      _
    %v50 = vld [vmem:[#allocation2] sm:$0x1]
    %v51 = vld [vmem:[#allocation5] sm:$0x1]
    %v52 = vld [vmem:[%s2] sm:$0x1]
    %v53 = vld [vmem:[%s3] sm:$0x1]
    %v54 = vsub.f32 %v50, %v52
    %v55 = vsub.f32 %v51, %v53
    %v56 = vsub.f32 %v54, %v55
    %v57 = vmul.f32 %v56, 0.1
    %v58 = vmin.f32 %v57, 0.0
    %v59 = vand.u32 2147483647, %v57
    %v60 = vsub.f32 0.0, %v59
    %v61 = vmul.f32 %v60, 1.442695
    %v62 = vpow.pop %v61
    %v63 = vadd.f32 %v62, 1.0
    %v64 = vlog2.pop %v63
    %v65 = vmul.f32 %v64, 0.6931472
    %v66 = vmul.f32 -0.5, %v62
    %v67 = vadd.f32 %v66, 1.0
    %v68 = vmul.f32 %v67, %v62
    %v69 = vand.u32 2147483647, %v62
    %vm70 = vcmp.lt.f32.partialorder %v69, 0.0004427343
    %v71 = vsel %vm70, %v68, %v65
    %v72 = vsub.f32 %v58, %v71
    %v73 = vsub.f32 0.0, %v72
    %v74 = vmul.f32 %v57, 0.05
    %v75 = vadd.f32 %v73, %v74
    %vm76 = vcmask 1040384
    %v77 = vsel %vm76, %v75, 0.0
    %78 = vadd.xlane.f32.xlu0 %v77
    %v79 = vpop.xlane.xlu0 %78
    %v80 = vrot.slane %v79, 4
    %v81 = vadd.f32 %v79, %v80
    %v82 = vrot.slane %v81, 2
    %v83 = vadd.f32 %v81, %v82
    %v84 = vrot.slane %v83, 1
    %v85 = vadd.f32 %v83, %v84
    %s86 = vtos %v85
    %s87 = ssub.f32 %s86, 83.17766
    %s88 = smul.f32 %s87, 0.125
    %v89 = vstv %s88
    %vm90 = vcmask 0
    %91 = vst.msk [vmem:[#allocation7] sm:$0x1] %vm90, %v89
    %v92 = vmul.f32 %v54, 0.1
    %93 = vst [vmem:[#allocation8] sm:$0x1] %v92
    %v94 = vmul.f32 %v55, 0.1
    %95 = vst [vmem:[#allocation10] sm:$0x1] %v94
    // Predicated region
    $region26: #{tpu_custom_call.1} parent=1 // pred_check
      _
    $region27: #{tpu_custom_call.1} parent=1 // pred_check_branch
      %97 = sbr.rel (0) target = $region29
    $region28: #{tpu_custom_call.1} parent=1 // pred_region
      %99 = vsyncadd [#allocation4], 0
      %s101 = sshll.u32 [#allocation7], 4
      %s102 = int_to_ptr.vmem [resolvable:$true] %s101
      %s103 = sshll.u32 %s4, 4
      %s104 = int_to_ptr.hbm [resolvable:$true] %s103
      %106 = dma.vmem_to_hbm [thread:$0]  %s102, 16, %s104, [#allocation4]
    $region29: #{tpu_custom_call.1} parent=1 // pred_fallthru
      _
    // Predicated region
    $region30: #{tpu_custom_call.1} parent=1 // pred_check
      _
    $region31: #{tpu_custom_call.1} parent=1 // pred_check_branch
      %108 = sbr.rel (0) target = $region33
    $region32: #{tpu_custom_call.1} parent=1 // pred_region
      %110 = vsyncadd [#allocation9], 0
      %s112 = sshll.u32 [#allocation8], 4
      %s113 = int_to_ptr.vmem [resolvable:$true] %s112
      %s114 = sshll.u32 %s5, 4
      %s115 = int_to_ptr.hbm [resolvable:$true] %s114
      %117 = dma.vmem_to_hbm [thread:$0]  %s113, 16, %s115, [#allocation9]
    $region33: #{tpu_custom_call.1} parent=1 // pred_fallthru
      _
    // Predicated region
    $region34: #{tpu_custom_call.1} parent=1 // pred_check
      _
    $region35: #{tpu_custom_call.1} parent=1 // pred_check_branch
      %119 = sbr.rel (0) target = $region37
    $region36: #{tpu_custom_call.1} parent=1 // pred_region
      %121 = vsyncadd [#allocation9], 0
      %s123 = sshll.u32 [#allocation10], 4
      %s124 = int_to_ptr.vmem [resolvable:$true] %s123
      %s125 = sshll.u32 %s6, 4
      %s126 = int_to_ptr.hbm [resolvable:$true] %s125
      %128 = dma.vmem_to_hbm [thread:$0]  %s124, 16, %s126, [#allocation9]
    $region37: #{tpu_custom_call.1} parent=1 // pred_fallthru
      _
    // Predicated region
    $region38: #{tpu_custom_call.1} parent=1 // pred_check
      _
    $region39: #{tpu_custom_call.1} parent=1 // pred_check_branch
      %130 = sbr.rel (0) target = $region41
    $region40: #{tpu_custom_call.1} parent=1 // pred_region
      %132 = dma.done [#allocation4], 16
    $region41: #{tpu_custom_call.1} parent=1 // pred_fallthru
      _
    // Predicated region
    $region42: #{tpu_custom_call.1} parent=1 // pred_check
      _
    $region43: #{tpu_custom_call.1} parent=1 // pred_check_branch
      %134 = sbr.rel (0) target = $region45
    $region44: #{tpu_custom_call.1} parent=1 // pred_region
      %136 = dma.done [#allocation9], 16
    $region45: #{tpu_custom_call.1} parent=1 // pred_fallthru
      _
    // Predicated region
    $region46: #{tpu_custom_call.1} parent=1 // pred_check
      _
    $region47: #{tpu_custom_call.1} parent=1 // pred_check_branch
      %138 = sbr.rel (0) target = $region49
    $region48: #{tpu_custom_call.1} parent=1 // pred_region
      %140 = dma.done [#allocation9], 16
    $region49: #{tpu_custom_call.1} parent=1 // pred_fallthru
      _
    %141 = vsyncpa [#allocation3], 1
    %142 = vsyncpa [#allocation6], 1
    %143 = vsyncpa [#allocation4], 1
    %144 = vsyncpa [#allocation9], 1

</llo_original>
